<compile_context>
chip_gen: v6e
topology: v6e:2x2x1
jax: 0.10.0
libtpu: 0.0.40
codegen_flags: <defaults>
</compile_context>

<pallas_src>
from functools import partial

import jax
import jax.numpy as jnp
from jax.experimental import pallas as pl
from jax.experimental.pallas import tpu as pltpu


def _round_up(x, m):
    return ((x + m - 1) // m) * m


def _policy_kernel(obs_ref,
                   w1_ref, b1_ref,
                   w2_ref, b2_ref,
                   wm_ref, bm_ref,
                   mean_ref):
    """tanh-MLP (2 hidden layers) + linear mean head for one batch tile.

    Weights arrive as bf16 (native MXU rate); bias add + tanh stay f32.
    Large tiles are split into 2 sub-chunks in a single basic block so the
    LLO scheduler can co-issue one chunk's MXU dots with the other chunk's
    EUP tanh.
    """
    w1 = w1_ref[...]
    w2 = w2_ref[...]
    wm = wm_ref[...]
    b1 = b1_ref[...]
    b2 = b2_ref[...]
    bm = bm_ref[...]

    tile_b = obs_ref.shape[0]
    n_chunks = 2 if (tile_b >= 256 and tile_b % 16 == 0) else 1
    chunk = tile_b // n_chunks
    for c in range(n_chunks):          # static Python loop -> one basic block
        rows = pl.ds(c * chunk, chunk)
        x = obs_ref[rows, :].astype(jnp.bfloat16)
        h = jnp.tanh(
            jnp.dot(x, w1, preferred_element_type=jnp.float32) + b1)
        h = jnp.tanh(
            jnp.dot(h.astype(jnp.bfloat16), w2,
                    preferred_element_type=jnp.float32) + b2)
        # NOTE: act_dim is tiny (<128 lanes) so this lowers to masked
        # vst.msk stores; negligible at B x 4 floats. For large act_dim keep
        # it a multiple of 128 (pad Wm/bm) for lane-dense stores.
        mean_ref[rows, :] = (
            jnp.dot(h.astype(jnp.bfloat16), wm,
                    preferred_element_type=jnp.float32) + bm)


# Rows of obs processed per grid step.  A 2048-row tile at hidden=256
# (double-buffered obs/out tiles + two hidden intermediates + resident
# weights) is ~9 MB, comfortably under the 32 MiB scoped-VMEM limit requested
# below on every chip, while amortizing per-step pipeline overhead.
_MAX_TILE_B = 2048

# Below this batch size the pallas_call launch / pipeline-prime cost dominates
# the few-kFLOP MLP; use the fused pure-XLA path (single-step action
# selection) instead.
_SMALL_BATCH_FALLBACK = 256


def _policy_mean(obs2d, w1, b1, w2, b2, wm, bm):
    B, obs_dim = obs2d.shape
    h1 = w1.shape[1]
    h2 = w2.shape[1]
    act_dim = wm.shape[1]

    # bf16 weights -> native MXU rate (f32 x f32 is emulated multi-pass).
    w1b = w1.astype(jnp.bfloat16)
    w2b = w2.astype(jnp.bfloat16)
    wmb = wm.astype(jnp.bfloat16)

    # Tile so the grid has >= 2 steps whenever possible (keeps both
    # TensorCores busy on v7x via the "parallel" batch axis), capped at
    # _MAX_TILE_B.  tile_b is a multiple of 8 (clean sublanes); the ragged
    # last block (B not a multiple of tile_b) is handled by Pallas with
    # masked stores — rows are independent, so no padding copy of obs.
    tile_b = min(_MAX_TILE_B, max(8, _round_up(pl.cdiv(B, 2), 8)))
    grid = (pl.cdiv(B, tile_b),)

    def resident(shape):
        # Full-array block, same block every grid step -> stays VMEM-resident.
        return pl.BlockSpec(shape, lambda i: (0, 0))

    return pl.pallas_call(
        _policy_kernel,
        out_shape=jax.ShapeDtypeStruct((B, act_dim), jnp.float32),
        grid=grid,
        in_specs=[
            pl.BlockSpec((tile_b, obs_dim), lambda i: (i, 0)),   # obs tile
            resident((obs_dim, h1)), resident((1, h1)),          # layer 1
            resident((h1, h2)),      resident((1, h2)),          # layer 2
            resident((h2, act_dim)), resident((1, act_dim)),     # mean head
        ],
        out_specs=pl.BlockSpec((tile_b, act_dim), lambda i: (i, 0)),
        compiler_params=pltpu.CompilerParams(
            dimension_semantics=("parallel",),
            vmem_limit_bytes=32 << 20),
    )(obs2d, w1b, b1, w2b, b2, wmb, bm)


@partial(jax.jit, static_argnames=("use_kernel",))
def gaussian_policy_forward(obs, params, use_kernel=None):
    """Returns (mean, logstd, std) exactly like GaussianPolicy.forward."""
    w1, b1, w2, b2, wm, bm, logstd = params
    obs2d = obs if obs.ndim == 2 else obs.reshape(1, -1)
    B = obs2d.shape[0]
    if use_kernel is None:
        use_kernel = B >= _SMALL_BATCH_FALLBACK
    if use_kernel:
        mean = _policy_mean(obs2d, w1, b1, w2, b2, wm, bm)
    else:
        h = jnp.tanh(obs2d @ w1 + b1)
        h = jnp.tanh(h @ w2 + b2)
        mean = h @ wm + bm
    # exp on the (1, act_dim) parameter, then broadcast: no BxA transcendentals.
    logstd_b = jnp.broadcast_to(logstd, mean.shape)
    std = jnp.broadcast_to(jnp.exp(logstd), mean.shape)
    return mean, logstd_b, std


def _init_linear(key, fan_in, fan_out):
    # torch.nn.Linear default init: U(-1/sqrt(fan_in), 1/sqrt(fan_in)).
    kw, kb = jax.random.split(key)
    bound = 1.0 / jnp.sqrt(jnp.float32(fan_in))
    w = jax.random.uniform(kw, (fan_in, fan_out), jnp.float32, -bound, bound)
    b = jax.random.uniform(kb, (1, fan_out), jnp.float32, -bound, bound)
    return w, b


def init_gaussian_policy_params(key, obs_dim, act_dim,
                                hidden_sizes=(256, 256), log_std=-0.5):
    h1, h2 = hidden_sizes
    k1, k2, k3 = jax.random.split(key, 3)
    w1, b1 = _init_linear(k1, obs_dim, h1)
    w2, b2 = _init_linear(k2, h1, h2)
    wm, bm = _init_linear(k3, h2, act_dim)
    wm = wm * 0.1          # mean_layer.weight.data.mul_(0.1)
    bm = bm * 0.0          # mean_layer.bias.data.mul_(0.0)
    logstd = jnp.ones((1, act_dim), jnp.float32) * log_std
    return (w1, b1, w2, b2, wm, bm, logstd)


def _reference_forward(obs, params):
    """Pure-JAX f32 reference for correctness checks."""
    w1, b1, w2, b2, wm, bm, logstd = params
    x = obs if obs.ndim == 2 else obs.reshape(1, -1)
    h = jnp.tanh(x @ w1 + b1)
    h = jnp.tanh(h @ w2 + b2)
    mean = h @ wm + bm
    logstd_b = jnp.broadcast_to(logstd, mean.shape)
    return mean, logstd_b, jnp.exp(logstd_b)


def _reference_forward_bf16(obs, params):
    """Reference with the same bf16 matmul-input casts as the kernel."""
    w1, b1, w2, b2, wm, bm, logstd = params
    x = obs if obs.ndim == 2 else obs.reshape(1, -1)

    def bdot(a, b):
        return jnp.dot(a.astype(jnp.bfloat16), b.astype(jnp.bfloat16),
                       preferred_element_type=jnp.float32)

    h = jnp.tanh(bdot(x, w1) + b1)
    h = jnp.tanh(bdot(h, w2) + b2)
    mean = bdot(h, wm) + bm
    logstd_b = jnp.broadcast_to(logstd, mean.shape)
    return mean, logstd_b, jnp.exp(logstd_b)


# TODO(synk): get_act (sampling) and logprob are plain JAX ops
# (jax.random.normal / Normal log-density) on top of forward's outputs and are
# intentionally not part of the kernel.

if __name__ == "__main__":
    obs_dim, act_dim = 12, 4
    hidden_sizes = (32, 32)
    batch = 8

    key = jax.random.PRNGKey(0)
    k_params, k_obs, k_obs2 = jax.random.split(key, 3)

    params = init_gaussian_policy_params(
        k_params, obs_dim, act_dim, hidden_sizes=hidden_sizes, log_std=-0.5)

    # --- 1) Small batch with the Pallas kernel path forced on.
    obs = jax.random.normal(k_obs, (batch, obs_dim), jnp.float32)
    mean, logstd, std = gaussian_policy_forward(obs, params, use_kernel=True)
    jax.block_until_ready((mean, logstd, std))

    r_mean, r_logstd, r_std = _reference_forward(obs, params)
    rb_mean, _, _ = _reference_forward_bf16(obs, params)

    assert mean.shape == (batch, act_dim)
    assert logstd.shape == (batch, act_dim)
    assert std.shape == (batch, act_dim)
    # Kernel uses bf16 MXU inputs: tight vs bf16 reference, loose vs f32 ref.
    assert jnp.allclose(mean, rb_mean, atol=2e-3, rtol=2e-3)
    assert jnp.allclose(mean, r_mean, atol=3e-2, rtol=3e-2)
    assert jnp.allclose(logstd, r_logstd, atol=1e-6, rtol=1e-6)
    assert jnp.allclose(std, r_std, atol=1e-6, rtol=1e-6)

    # --- 2) Multi-step grid + ragged last block (B not a multiple of tile_b).
    B2 = 300
    obs2 = jax.random.normal(k_obs2, (B2, obs_dim), jnp.float32)
    mean2, logstd2, std2 = gaussian_policy_forward(obs2, params,
                                                   use_kernel=True)
    jax.block_until_ready((mean2, logstd2, std2))
    r_mean2, _, _ = _reference_forward(obs2, params)
    rb_mean2, _, _ = _reference_forward_bf16(obs2, params)
    assert mean2.shape == (B2, act_dim)
    assert jnp.allclose(mean2, rb_mean2, atol=2e-3, rtol=2e-3)
    assert jnp.allclose(mean2, r_mean2, atol=3e-2, rtol=3e-2)

    # --- 3) Default dispatch (small-batch XLA fallback) + 1-D obs handling.
    m3, l3, s3 = gaussian_policy_forward(obs, params)
    jax.block_until_ready((m3, l3, s3))
    assert jnp.allclose(m3, r_mean, atol=1e-4, rtol=1e-4)
    m4, l4, s4 = gaussian_policy_forward(obs[0], params)
    jax.block_until_ready((m4, l4, s4))
    assert m4.shape == (1, act_dim)

    print("KERNEL_OK")
</pallas_src>

<mosaic_0001>
module attributes {stable_mosaic.version = 11 : i64} {
  func.func @_policy_kernel(%arg0: i32, %arg1: memref<8x12xf32, #tpu.memory_space<vmem>>, %arg2: memref<12x32xbf16, #tpu.memory_space<vmem>>, %arg3: memref<1x32xf32, #tpu.memory_space<vmem>>, %arg4: memref<32x32xbf16, #tpu.memory_space<vmem>>, %arg5: memref<1x32xf32, #tpu.memory_space<vmem>>, %arg6: memref<32x4xbf16, #tpu.memory_space<vmem>>, %arg7: memref<1x4xf32, #tpu.memory_space<vmem>>, %arg8: memref<8x4xf32, #tpu.memory_space<vmem>>) attributes {dimension_semantics = [#tpu.dimension_semantics<parallel>], iteration_bounds = array<i64: 1>, scalar_prefetch = 0 : i64, scratch_operands = 0 : i64, tpu.core_type = #tpu.core_type<tc>, window_params = [{transform_indices = @transform_0, window_bounds = array<i64: 8, 12>}, {pipeline_mode = #tpu.pipeline_mode<synchronous>, transform_indices = @transform_1, window_bounds = array<i64: 12, 32>}, {pipeline_mode = #tpu.pipeline_mode<synchronous>, transform_indices = @transform_2, window_bounds = array<i64: 1, 32>}, {pipeline_mode = #tpu.pipeline_mode<synchronous>, transform_indices = @transform_3, window_bounds = array<i64: 32, 32>}, {pipeline_mode = #tpu.pipeline_mode<synchronous>, transform_indices = @transform_4, window_bounds = array<i64: 1, 32>}, {pipeline_mode = #tpu.pipeline_mode<synchronous>, transform_indices = @transform_5, window_bounds = array<i64: 32, 4>}, {pipeline_mode = #tpu.pipeline_mode<synchronous>, transform_indices = @transform_6, window_bounds = array<i64: 1, 4>}, {transform_indices = @transform_7, window_bounds = array<i64: 8, 4>}]} {
    %c0 = arith.constant 0 : index
    %c0_0 = arith.constant 0 : index
    %0 = vector.load %arg2[%c0, %c0_0] : memref<12x32xbf16, #tpu.memory_space<vmem>>, vector<12x32xbf16>
    %c0_1 = arith.constant 0 : index
    %c0_2 = arith.constant 0 : index
    %1 = vector.load %arg4[%c0_1, %c0_2] : memref<32x32xbf16, #tpu.memory_space<vmem>>, vector<32x32xbf16>
    %c0_3 = arith.constant 0 : index
    %c0_4 = arith.constant 0 : index
    %2 = vector.load %arg6[%c0_3, %c0_4] : memref<32x4xbf16, #tpu.memory_space<vmem>>, vector<32x4xbf16>
    %c0_5 = arith.constant 0 : index
    %c0_6 = arith.constant 0 : index
    %3 = vector.load %arg3[%c0_5, %c0_6] : memref<1x32xf32, #tpu.memory_space<vmem>>, vector<1x32xf32>
    %c0_7 = arith.constant 0 : index
    %c0_8 = arith.constant 0 : index
    %4 = vector.load %arg5[%c0_7, %c0_8] : memref<1x32xf32, #tpu.memory_space<vmem>>, vector<1x32xf32>
    %c0_9 = arith.constant 0 : index
    %c0_10 = arith.constant 0 : index
    %5 = vector.load %arg7[%c0_9, %c0_10] : memref<1x4xf32, #tpu.memory_space<vmem>>, vector<1x4xf32>
    %c0_11 = arith.constant 0 : index
    %c0_12 = arith.constant 0 : index
    %6 = vector.load %arg1[%c0_11, %c0_12] : memref<8x12xf32, #tpu.memory_space<vmem>>, vector<8x12xf32>
    %7 = arith.truncf %6 : vector<8x12xf32> to vector<8x12xbf16>
    %cst = arith.constant dense<0.000000e+00> : vector<8x32xf32>
    %8 = tpu.matmul %7, %0, %cst {dimension_numbers = #tpu.dot_dimension_numbers<[1], [0], [0], [1], [0, 0, 1, 1], [], []>} : vector<8x12xbf16>, vector<12x32xbf16>, vector<8x32xf32> -> vector<8x32xf32>
    %9 = vector.broadcast %3 : vector<1x32xf32> to vector<8x32xf32>
    %10 = arith.addf %8, %9 : vector<8x32xf32>
    %11 = math.tanh %10 : vector<8x32xf32>
    %12 = arith.truncf %11 : vector<8x32xf32> to vector<8x32xbf16>
    %cst_13 = arith.constant dense<0.000000e+00> : vector<8x32xf32>
    %13 = tpu.matmul %12, %1, %cst_13 {dimension_numbers = #tpu.dot_dimension_numbers<[1], [0], [0], [1], [0, 0, 1, 1], [], []>} : vector<8x32xbf16>, vector<32x32xbf16>, vector<8x32xf32> -> vector<8x32xf32>
    %14 = vector.broadcast %4 : vector<1x32xf32> to vector<8x32xf32>
    %15 = arith.addf %13, %14 : vector<8x32xf32>
    %16 = math.tanh %15 : vector<8x32xf32>
    %17 = arith.truncf %16 : vector<8x32xf32> to vector<8x32xbf16>
    %cst_14 = arith.constant dense<0.000000e+00> : vector<8x4xf32>
    %18 = tpu.matmul %17, %2, %cst_14 {dimension_numbers = #tpu.dot_dimension_numbers<[1], [0], [0], [1], [0, 0, 1, 1], [], []>} : vector<8x32xbf16>, vector<32x4xbf16>, vector<8x4xf32> -> vector<8x4xf32>
    %19 = vector.broadcast %5 : vector<1x4xf32> to vector<8x4xf32>
    %20 = arith.addf %18, %19 : vector<8x4xf32>
    %c0_15 = arith.constant 0 : index
    %c0_16 = arith.constant 0 : index
    %21 = vector.load %arg8[%c0_15, %c0_16] : memref<8x4xf32, #tpu.memory_space<vmem>>, vector<8x4xf32>
    tpu.vector_store %arg8[%c0_15, %c0_16], %20 {strides = array<i32>} : memref<8x4xf32, #tpu.memory_space<vmem>>, vector<8x4xf32>,
    return
  }
  func.func @transform_0(%arg0: i32) -> (i32, i32) {
    %c0_i32 = arith.constant 0 : i32
    %c0_i32_0 = arith.constant 0 : i32
    return %arg0, %c0_i32 : i32, i32
  }
  func.func @transform_1(%arg0: i32) -> (i32, i32) {
    %c0_i32 = arith.constant 0 : i32
    %c0_i32_0 = arith.constant 0 : i32
    %c0_i32_1 = arith.constant 0 : i32
    return %c0_i32, %c0_i32_0 : i32, i32
  }
  func.func @transform_2(%arg0: i32) -> (i32, i32) {
    %c0_i32 = arith.constant 0 : i32
    %c0_i32_0 = arith.constant 0 : i32
    %c0_i32_1 = arith.constant 0 : i32
    return %c0_i32, %c0_i32_0 : i32, i32
  }
  func.func @transform_3(%arg0: i32) -> (i32, i32) {
    %c0_i32 = arith.constant 0 : i32
    %c0_i32_0 = arith.constant 0 : i32
    %c0_i32_1 = arith.constant 0 : i32
    return %c0_i32, %c0_i32_0 : i32, i32
  }
  func.func @transform_4(%arg0: i32) -> (i32, i32) {
    %c0_i32 = arith.constant 0 : i32
    %c0_i32_0 = arith.constant 0 : i32
    %c0_i32_1 = arith.constant 0 : i32
    return %c0_i32, %c0_i32_0 : i32, i32
  }
  func.func @transform_5(%arg0: i32) -> (i32, i32) {
    %c0_i32 = arith.constant 0 : i32
    %c0_i32_0 = arith.constant 0 : i32
    %c0_i32_1 = arith.constant 0 : i32
    return %c0_i32, %c0_i32_0 : i32, i32
  }
  func.func @transform_6(%arg0: i32) -> (i32, i32) {
    %c0_i32 = arith.constant 0 : i32
    %c0_i32_0 = arith.constant 0 : i32
    %c0_i32_1 = arith.constant 0 : i32
    return %c0_i32, %c0_i32_0 : i32, i32
  }
  func.func @transform_7(%arg0: i32) -> (i32, i32) {
    %c0_i32 = arith.constant 0 : i32
    %c0_i32_0 = arith.constant 0 : i32
    return %arg0, %c0_i32 : i32, i32
  }
}

</mosaic_0001>

<llo_original>
// kernel: gaussian_policy_forward.1
$region0: #{gaussian_policy_forward.1}
  #allocation0 [shape = 'u32[]', space=smem, size = 0x4, offset = 0x4, fixed_abs, tag = 'smem constant byte address 0x4 - core index']
  #allocation1 [shape = 'u32[144,128]{1,0:T(1,128)}', space=vmem, size = 0x12000, scoped, tag = 'internal scratch']
  %s0 = inlined_call_operand.vmem [shape: f32[8,12], index: 0, kind: input, shape index: {}]
  %s1 = inlined_call_operand.vmem [shape: bf16[12,32], index: 1, kind: input, shape index: {}]
  %s2 = inlined_call_operand.vmem [shape: f32[1,32], index: 2, kind: input, shape index: {}]
  %s3 = inlined_call_operand.vmem [shape: bf16[32,32], index: 3, kind: input, shape index: {}]
  %s4 = inlined_call_operand.vmem [shape: f32[1,32], index: 4, kind: input, shape index: {}]
  %s5 = inlined_call_operand.vmem [shape: bf16[32,4], index: 5, kind: input, shape index: {}]
  %s6 = inlined_call_operand.vmem [shape: f32[1,4], index: 6, kind: input, shape index: {}]
  %s7 = inlined_call_operand.vmem [shape: f32[8,4], index: 7, kind: output, shape index: {}]
  %s8 = sld [smem:[#allocation0]]
  $region38: #{gaussian_policy_forward.1} parent=0
    _
  %s10 = ssub.s32 1, %s8
  %s11 = scalar_select 0, %s10, %s8
  // Predicated region
  $region2: #{gaussian_policy_forward.1} parent=0 // pred_check
    _
  $region3: #{gaussian_policy_forward.1} parent=0 // pred_check_branch
    %13 = sbr.rel (0) target = $region5
  $region4: #{gaussian_policy_forward.1} parent=0 // pred_region
    _
  $region5: #{gaussian_policy_forward.1} parent=0 // pred_fallthru
    _
  // Predicated region
  $region6: #{gaussian_policy_forward.1} parent=0 // pred_check
    _
  $region7: #{gaussian_policy_forward.1} parent=0 // pred_check_branch
    %15 = sbr.rel (0) target = $region9
  $region8: #{gaussian_policy_forward.1} parent=0 // pred_region
    _
  $region9: #{gaussian_policy_forward.1} parent=0 // pred_fallthru
    _
  // Predicated region
  $region10: #{gaussian_policy_forward.1} parent=0 // pred_check
    _
  $region11: #{gaussian_policy_forward.1} parent=0 // pred_check_branch
    %17 = sbr.rel (0) target = $region13
  $region12: #{gaussian_policy_forward.1} parent=0 // pred_region
    _
  $region13: #{gaussian_policy_forward.1} parent=0 // pred_fallthru
    _
  // Predicated region
  $region14: #{gaussian_policy_forward.1} parent=0 // pred_check
    _
  $region15: #{gaussian_policy_forward.1} parent=0 // pred_check_branch
    %19 = sbr.rel (0) target = $region17
  $region16: #{gaussian_policy_forward.1} parent=0 // pred_region
    _
  $region17: #{gaussian_policy_forward.1} parent=0 // pred_fallthru
    _
  // Predicated region
  $region18: #{gaussian_policy_forward.1} parent=0 // pred_check
    _
  $region19: #{gaussian_policy_forward.1} parent=0 // pred_check_branch
    %21 = sbr.rel (0) target = $region21
  $region20: #{gaussian_policy_forward.1} parent=0 // pred_region
    _
  $region21: #{gaussian_policy_forward.1} parent=0 // pred_fallthru
    _
  // Predicated region
  $region22: #{gaussian_policy_forward.1} parent=0 // pred_check
    _
  $region23: #{gaussian_policy_forward.1} parent=0 // pred_check_branch
    %23 = sbr.rel (0) target = $region25
  $region24: #{gaussian_policy_forward.1} parent=0 // pred_region
    _
  $region25: #{gaussian_policy_forward.1} parent=0 // pred_fallthru
    _
  // Predicated region
  $region26: #{gaussian_policy_forward.1} parent=0 // pred_check
    _
  $region27: #{gaussian_policy_forward.1} parent=0 // pred_check_branch
    %25 = sbr.rel (0) target = $region29
  $region28: #{gaussian_policy_forward.1} parent=0 // pred_region
    _
  $region29: #{gaussian_policy_forward.1} parent=0 // pred_fallthru
    _
  %v27 = vld [vmem:[%s1] sm:$0xf]
  %v28 = vld [vmem:[%s1 + $0x4] sm:$0x3]
  %v29 = vld [vmem:[%s3] sm:$0xf]
  %v30 = vld [vmem:[%s3 + $0x4] sm:$0xf]
  %v31 = vld [vmem:[%s3 + $0x8] sm:$0xf]
  %v32 = vld [vmem:[%s3 + $0xc] sm:$0xf]
  %v33 = vld [vmem:[%s5] sm:$0xf]
  %v34 = vld [vmem:[%s5 + $0x4] sm:$0xf]
  %v35 = vld [vmem:[%s5 + $0x8] sm:$0xf]
  %v36 = vld [vmem:[%s5 + $0xc] sm:$0xf]
  %v37 = vld [vmem:[%s2] sm:$0x1]
  %v38 = vld [vmem:[%s4] sm:$0x1]
  %v39 = vld [vmem:[%s6] sm:$0x1]
  %v40 = vld [vmem:[%s0] sm:$0xff]
  %v41 = vpack.c.bf16 %v40, %v40
  %v43 = vlaneseq
  %v44 = vshrl.u32 %v43, 7
  %v45 = vsub.s32 0, %v44
  %v46 = vrot.slane %v37, %v45
  %v50 = vunpack.c.l.b16 %v27
  %v51 = vunpack.c.l.b16 %v28
  %v52 = vpack.c.b16 %v51, %v50
  %vm53 = vcmask 97280
  %v55 = vsel %vm53, %v41, 0
  %vm57 = vcmask 1045504
  %v59 = vsel %vm57, %v52, 0
  %61 = vmatprep.subr.bf16.mxu0 0
  %62 = vmatpush1.bf16.msra.mxu0 0
  %63 = vmatprep.subr.bf16.mxu0 0
  %64 = vmatpush1.bf16.msra.mxu0 0
  %65 = vmatprep.subr.bf16.mxu0 0
  %66 = vmatpush1.bf16.msra.mxu0 0
  %67 = vmatprep.subr.bf16.mxu0 0
  %68 = vmatpush1.bf16.msra.mxu0 0
  %69 = vmatprep.subr.bf16.mxu0 0
  %70 = vmatpush1.bf16.msra.mxu0 0
  %71 = vmatprep.subr.bf16.mxu0 0
  %72 = vmatpush1.bf16.msra.mxu0 0
  %73 = vmatprep.subr.bf16.mxu0 0
  %74 = vmatpush1.bf16.msra.mxu0 0
  %75 = vmatprep.subr.bf16.mxu0 0
  %76 = vmatpush1.bf16.msra.mxu0 %v59
  %77 = vmatprep.subr.bf16.mxu0 0
  %78 = vmatpush2.bf16.msra.mxu0 0
  %79 = vmatprep.subr.bf16.mxu0 0
  %80 = vmatpush2.bf16.msra.mxu0 0
  %81 = vmatprep.subr.bf16.mxu0 0
  %82 = vmatpush2.bf16.msra.mxu0 0
  %83 = vmatprep.subr.bf16.mxu0 0
  %84 = vmatpush2.bf16.msra.mxu0 0
  %85 = vmatprep.subr.bf16.mxu0 0
  %86 = vmatpush2.bf16.msra.mxu0 0
  %87 = vmatprep.subr.bf16.mxu0 0
  %88 = vmatpush2.bf16.msra.mxu0 0
  %89 = vmatprep.subr.bf16.mxu0 0
  %90 = vmatpush2.bf16.msra.mxu0 0
  %91 = vmatprep.subr.bf16.mxu0 0
  %92 = vmatpush2.bf16.msra.mxu0 0
  %93 = vmatprep.mubr.bf16.mxu0 0
  %94 = vmatmul.mubr.bf16.gmra.mxu0 %v55
  %v95 = vpop.f32.mrf.mxu0
  %v96 = vadd.f32 %v46, %v95
  %v97 = vpop.f32.mrf.mxu0
  %v98 = vpop.f32.mrf.mxu0
  %v99 = vpop.f32.mrf.mxu0
  %100 = vdwg.mxu0
  %v101 = vtanh.pop %v96
  %v102 = vpack.c.bf16 %v101, %v101
  %v104 = vlaneseq
  %v105 = vshrl.u32 %v104, 7
  %v106 = vsub.s32 0, %v105
  %v107 = vrot.slane %v38, %v106
  %v113 = vunpack.c.l.b16 %v29
  %v114 = vunpack.c.l.b16 %v30
  %v115 = vunpack.c.l.b16 %v31
  %v116 = vunpack.c.l.b16 %v32
  %v117 = vpack.c.b16 %v114, %v113
  %v118 = vpack.c.b16 %v116, %v115
  %vm121 = vcmask 261120
  %v123 = vsel %vm121, %v102, 0
  %125 = vmatprep.subr.bf16.mxu0 0
  %126 = vmatpush1.bf16.msra.mxu0 0
  %127 = vmatprep.subr.bf16.mxu0 0
  %128 = vmatpush1.bf16.msra.mxu0 0
  %129 = vmatprep.subr.bf16.mxu0 0
  %130 = vmatpush1.bf16.msra.mxu0 0
  %131 = vmatprep.subr.bf16.mxu0 0
  %132 = vmatpush1.bf16.msra.mxu0 0
  %133 = vmatprep.subr.bf16.mxu0 0
  %134 = vmatpush1.bf16.msra.mxu0 0
  %135 = vmatprep.subr.bf16.mxu0 0
  %136 = vmatpush1.bf16.msra.mxu0 0
  %137 = vmatprep.subr.bf16.mxu0 0
  %138 = vmatpush1.bf16.msra.mxu0 %v118
  %139 = vmatprep.subr.bf16.mxu0 0
  %140 = vmatpush1.bf16.msra.mxu0 %v117
  %141 = vmatprep.subr.bf16.mxu0 0
  %142 = vmatpush2.bf16.msra.mxu0 0
  %143 = vmatprep.subr.bf16.mxu0 0
  %144 = vmatpush2.bf16.msra.mxu0 0
  %145 = vmatprep.subr.bf16.mxu0 0
  %146 = vmatpush2.bf16.msra.mxu0 0
  %147 = vmatprep.subr.bf16.mxu0 0
  %148 = vmatpush2.bf16.msra.mxu0 0
  %149 = vmatprep.subr.bf16.mxu0 0
  %150 = vmatpush2.bf16.msra.mxu0 0
  %151 = vmatprep.subr.bf16.mxu0 0
  %152 = vmatpush2.bf16.msra.mxu0 0
  %153 = vmatprep.subr.bf16.mxu0 0
  %154 = vmatpush2.bf16.msra.mxu0 0
  %155 = vmatprep.subr.bf16.mxu0 0
  %156 = vmatpush2.bf16.msra.mxu0 0
  %157 = vmatprep.mubr.bf16.mxu0 0
  %158 = vmatmul.mubr.bf16.gmra.mxu0 %v123
  %v159 = vpop.f32.mrf.mxu0
  %v160 = vadd.f32 %v107, %v159
  %v161 = vpop.f32.mrf.mxu0
  %v162 = vpop.f32.mrf.mxu0
  %v163 = vpop.f32.mrf.mxu0
  %164 = vdwg.mxu0
  %v165 = vtanh.pop %v160
  %v166 = vpack.c.bf16 %v165, %v165
  %v168 = vlaneseq
  %v169 = vshrl.u32 %v168, 7
  %v170 = vsub.s32 0, %v169
  %v171 = vrot.slane %v39, %v170
  %v177 = vunpack.c.l.b16 %v33
  %v178 = vunpack.c.l.b16 %v34
  %v179 = vunpack.c.l.b16 %v35
  %v180 = vunpack.c.l.b16 %v36
  %v181 = vpack.c.b16 %v178, %v177
  %v182 = vpack.c.b16 %v180, %v179
  %v186 = vsel %vm121, %v166, 0
  %188 = vmatprep.subr.bf16.mxu0 0
  %189 = vmatpush1.bf16.msra.mxu0 0
  %190 = vmatprep.subr.bf16.mxu0 0
  %191 = vmatpush1.bf16.msra.mxu0 0
  %192 = vmatprep.subr.bf16.mxu0 0
  %193 = vmatpush1.bf16.msra.mxu0 0
  %194 = vmatprep.subr.bf16.mxu0 0
  %195 = vmatpush1.bf16.msra.mxu0 0
  %196 = vmatprep.subr.bf16.mxu0 0
  %197 = vmatpush1.bf16.msra.mxu0 0
  %198 = vmatprep.subr.bf16.mxu0 0
  %199 = vmatpush1.bf16.msra.mxu0 0
  %200 = vmatprep.subr.bf16.mxu0 0
  %201 = vmatpush1.bf16.msra.mxu0 %v182
  %202 = vmatprep.subr.bf16.mxu0 0
  %203 = vmatpush1.bf16.msra.mxu0 %v181
  %204 = vmatprep.subr.bf16.mxu0 0
  %205 = vmatpush2.bf16.msra.mxu0 0
  %206 = vmatprep.subr.bf16.mxu0 0
  %207 = vmatpush2.bf16.msra.mxu0 0
  %208 = vmatprep.subr.bf16.mxu0 0
  %209 = vmatpush2.bf16.msra.mxu0 0
  %210 = vmatprep.subr.bf16.mxu0 0
  %211 = vmatpush2.bf16.msra.mxu0 0
  %212 = vmatprep.subr.bf16.mxu0 0
  %213 = vmatpush2.bf16.msra.mxu0 0
  %214 = vmatprep.subr.bf16.mxu0 0
  %215 = vmatpush2.bf16.msra.mxu0 0
  %216 = vmatprep.subr.bf16.mxu0 0
  %217 = vmatpush2.bf16.msra.mxu0 0
  %218 = vmatprep.subr.bf16.mxu0 0
  %219 = vmatpush2.bf16.msra.mxu0 0
  %220 = vmatprep.mubr.bf16.mxu0 0
  %221 = vmatmul.mubr.bf16.gmra.mxu0 %v186
  %v222 = vpop.f32.mrf.mxu0
  %v223 = vadd.f32 %v171, %v222
  %v224 = vpop.f32.mrf.mxu0
  %v225 = vpop.f32.mrf.mxu0
  %v226 = vpop.f32.mrf.mxu0
  %227 = vdwg.mxu0
  %vm228 = vcmask 31744
  %229 = vst.msk [vmem:[%s7] sm:$0xff] %vm228, %v223
  // Predicated region
  $region30: #{gaussian_policy_forward.1} parent=0 // pred_check
    _
  $region31: #{gaussian_policy_forward.1} parent=0 // pred_check_branch
    %231 = sbr.rel (0) target = $region33
  $region32: #{gaussian_policy_forward.1} parent=0 // pred_region
    _
  $region33: #{gaussian_policy_forward.1} parent=0 // pred_fallthru
    _
  // Predicated region
  $region34: #{gaussian_policy_forward.1} parent=0 // pred_check
    _
  $region35: #{gaussian_policy_forward.1} parent=0 // pred_check_branch
    %233 = sbr.rel (0) target = $region37
  $region36: #{gaussian_policy_forward.1} parent=0 // pred_region
    _
  $region37: #{gaussian_policy_forward.1} parent=0 // pred_fallthru
    _

</llo_original>
